<compile_context>
chip_gen: v7x
topology: tpu7x:2x2x1
jax: 0.10.0
libtpu: 0.0.40
codegen_flags: <defaults>
</compile_context>

<pallas_src>
import functools

import jax
import jax.numpy as jnp
import numpy as np
from jax.experimental import pallas as pl
from jax.experimental.pallas import tpu as pltpu


def _round_up(x, m):
    return ((x + m - 1) // m) * m


@functools.lru_cache(maxsize=1)
def _vmem_capacity_bytes():
    """Physical per-core VMEM capacity; conservative fallback if the query fails."""
    try:
        info = pltpu.get_tpu_info()
        cap = getattr(info, "vmem_capacity_bytes", None)
        if cap:
            return int(cap)
    except Exception:
        pass
    return 64 * 1024 * 1024  # v7x per-TC size: safe lower bound for all generations


def _simclr_kernel(q_ref, pos_ref, k_ref, loss_ref, acc_ref, *,
                   batch, views, n_valid, m_valid, inv_temp):
    """q_ref:   (tq, D_pad)  query tile (view-major rows, zero-padded past n_valid).
    pos_ref:  (tq, D_pad)  per-row positive-key sums (same tiling as q).
    k_ref:    (D_pad, M_pad) resident keys, already transposed (contraction dim first).
    loss_ref / acc_ref: (1, 1, 1) per-tile partial outputs (summed in the wrapper)."""
    tq = q_ref.shape[0]
    row0 = pl.program_id(0) * tq

    q = q_ref[...].astype(jnp.float32)
    qs = q * jnp.float32(inv_temp)                 # fold 1/temp into the queries

    # (tq, M) similarities on the MXU, f32 accumulation.  Keys are pre-oriented
    # (D, M) so this is a plain matmul -- no per-step key transpose.
    lhs = qs if k_ref.dtype == qs.dtype else qs.astype(k_ref.dtype)
    sims = jax.lax.dot_general(lhs, k_ref[...], (((1,), (0,)), ((), ())),
                               preferred_element_type=jnp.float32)
    m_cols = sims.shape[1]

    # Column-side (1, M) and row-side (tq, 1) index vectors; never (tq, M) int slabs.
    col = jax.lax.broadcasted_iota(jnp.int32, (1, m_cols), 1)
    row = jax.lax.broadcasted_iota(jnp.int32, (tq, 1), 0) + row0
    row_ok = (row < n_valid).astype(jnp.float32)   # padded query rows contribute 0

    neg_inf = jnp.float32(-jnp.inf)
    # Diagonal and padded key columns never participate in lse / top-k.
    invalid = jnp.logical_or(col == row, col >= m_valid)
    sims = jnp.where(invalid, neg_inf, sims)

    # Positive pairs: per-row dot against the precomputed positive-key sum (O(tq*D)
    # instead of a (tq, M) select + full-lane reduction).  inv_temp already in qs.
    sum_pos = jnp.sum(qs * pos_ref[...].astype(jnp.float32), axis=1, keepdims=True)

    # log-sum-exp over all (self + extra) columns; -inf entries contribute 0.
    row_max = jnp.max(sims, axis=1, keepdims=True)
    lse = row_max + jnp.log(jnp.sum(jnp.exp(sims - row_max), axis=1, keepdims=True))

    per_row = sum_pos * jnp.float32(1.0 / (views - 1)) - lse
    loss_ref[...] = jnp.sum(per_row * row_ok, axis=0, keepdims=True)[None]

    # top-(V-1) accuracy: threshold = (V-1)-th largest per row (reuses row_max for the
    # first -> V==2 costs zero extra reductions), count matching columns at/above it,
    # clamp to V-1 so value ties cannot overcount.
    match = (col % batch) == (row % batch)         # torch's mod-B quirk incl. extras
    thresh = row_max
    work = sims
    for _ in range(views - 2):
        work = jnp.where(work >= thresh, neg_inf, work)
        thresh = jnp.max(work, axis=1, keepdims=True)
    in_top = sims >= thresh
    correct = jnp.sum(jnp.where(jnp.logical_and(match, in_top), 1.0, 0.0),
                      axis=1, keepdims=True)
    correct = jnp.minimum(correct, jnp.float32(views - 1))
    acc_ref[...] = jnp.sum(correct * row_ok, axis=0, keepdims=True)[None]


def multiview_simclr_loss(projs, extra_projs=None, temp=0.2, *,
                          block_rows=None, use_bf16_matmul=False):
    batch, views, dim = projs.shape
    if views < 2:
        raise ValueError("MultiViewSimCLRLoss requires num_views >= 2")
    n = views * batch

    # View-major flatten, identical to torch `projs.transpose(1,0).flatten(0,1)`.
    p = jnp.transpose(projs, (1, 0, 2)).reshape(n, dim).astype(jnp.float32)
    if extra_projs is not None:
        keys = jnp.concatenate([p, jnp.asarray(extra_projs, jnp.float32)], axis=0)
    else:
        keys = p
    m_valid = keys.shape[0]
    m_pad = _round_up(m_valid, 128)        # lane-dense sims columns
    d_pad = _round_up(dim, 128)            # lane-dense q / contraction dim

    # Positive-key sums: pos_key_sum[i] = sum_v keys[v*B + i%B] - keys[i]  (N, D).
    grp = p.reshape(views, batch, dim).sum(axis=0)          # (B, D)
    pos_key_sum = jnp.tile(grp, (views, 1)) - p             # (N, D)

    key_dtype = jnp.bfloat16 if use_bf16_matmul else jnp.float32
    key_isize = jnp.dtype(key_dtype).itemsize

    # --- generation-aware VMEM budgeting -------------------------------------
    vmem_cap = _vmem_capacity_bytes()              # 128 MiB v5e/v6e, 64 MiB v7x
    vmem_limit = int(vmem_cap * 0.75)              # explicit scoped-VMEM raise
    budget = int(vmem_cap * 0.60)                  # headroom under the limit

    # Resident keys: budget 2x for possible double-buffering of the constant block.
    k_bytes = 2 * d_pad * m_pad * key_isize
    # Live (tq, M) f32 slabs (sims + masks/exp; +top-k work copy when views > 2),
    # plus the double-buffered streamed (tq, D_pad) f32 q / pos tiles.
    slabs = 6 if views > 2 else 5
    per_row_bytes = slabs * m_pad * 4 + 2 * 2 * d_pad * 4 + 64
    tq_cap = max(8, (budget - k_bytes) // per_row_bytes)

    tq_afford = min(1024, tq_cap)
    if tq_afford >= 256:                           # 2x256 MXU on v6e/v7x
        tq_afford = (tq_afford // 256) * 256
    elif tq_afford >= 128:                         # 4x128 MXU on v5e
        tq_afford = (tq_afford // 128) * 128
    else:
        tq_afford = max(8, (tq_afford // 8) * 8)
    tq = min(tq_afford, _round_up(n, 8))           # don't exceed the problem size
    if block_rows is not None:
        tq = min(tq, _round_up(block_rows, 8))
    tq = max(8, (tq // 8) * 8)
    n_pad = _round_up(n, tq)
    num_tiles = n_pad // tq
    # --------------------------------------------------------------------------

    q_pad = jnp.pad(p, ((0, n_pad - n), (0, d_pad - dim)))
    pos_pad = jnp.pad(pos_key_sum, ((0, n_pad - n), (0, d_pad - dim)))
    k_pad = jnp.pad(keys, ((0, m_pad - m_valid), (0, d_pad - dim)))
    k_t = jnp.transpose(k_pad, (1, 0)).astype(key_dtype)   # (D_pad, M_pad), once in XLA

    kernel = functools.partial(
        _simclr_kernel, batch=batch, views=views, n_valid=n,
        m_valid=m_valid, inv_temp=1.0 / float(temp))

    loss_parts, acc_parts = pl.pallas_call(
        kernel,
        out_shape=(jax.ShapeDtypeStruct((num_tiles, 1, 1), jnp.float32),
                   jax.ShapeDtypeStruct((num_tiles, 1, 1), jnp.float32)),
        grid=(num_tiles,),
        in_specs=[
            pl.BlockSpec((tq, d_pad), lambda i: (i, 0)),      # streamed query tiles
            pl.BlockSpec((tq, d_pad), lambda i: (i, 0)),      # streamed positive sums
            pl.BlockSpec((d_pad, m_pad), lambda i: (0, 0)),   # keys resident in VMEM
        ],
        out_specs=(
            pl.BlockSpec((1, 1, 1), lambda i: (i, 0, 0)),     # per-tile partial loss
            pl.BlockSpec((1, 1, 1), lambda i: (i, 0, 0)),     # per-tile correct counts
        ),
        # Per-tile partial outputs -> the grid axis is embarrassingly parallel
        # (v7x megacore shards tiles across its two TensorCores; neutral on v5e/v6e).
        compiler_params=pltpu.CompilerParams(
            dimension_semantics=("parallel",),
            vmem_limit_bytes=vmem_limit),
    )(q_pad, pos_pad, k_t)

    loss = -jnp.sum(loss_parts) / n
    acc = jnp.sum(acc_parts) / ((views - 1) * n)
    return loss, acc


def _reference(projs, extra_projs=None, temp=0.2):
    """Pure-JAX mirror of the PyTorch forward, for validation."""
    B, V, D = projs.shape
    N = V * B
    hi = jax.lax.Precision.HIGHEST
    P = jnp.transpose(projs, (1, 0, 2)).reshape(N, D).astype(jnp.float32)
    sims = jnp.matmul(P, P.T, precision=hi) / temp
    ar = jnp.arange(N)
    sims = sims.at[ar, ar].set(-jnp.inf)
    pos = []
    for x in range(1, V):
        ar_roll = jnp.roll(ar, x * B)
        pos.append(sims[ar, ar_roll])
    sum_pos = jnp.stack(pos, axis=1).sum(axis=1)
    if extra_projs is not None:
        extra_sims = jnp.matmul(P, extra_projs.astype(jnp.float32).T,
                                precision=hi) / temp
        sims = jnp.concatenate([sims, extra_sims], axis=1)
    max_sims = jnp.max(sims, axis=1)
    lse = max_sims + jnp.log(jnp.sum(jnp.exp(sims - max_sims[:, None]), axis=1))
    loss = -jnp.mean(sum_pos / (V - 1) - lse)
    _, topk = jax.lax.top_k(sims, V - 1)
    correct = jnp.sum((topk % B) == (ar[:, None] % B), axis=1)
    acc = jnp.mean(correct / (V - 1))
    return loss, acc


if __name__ == "__main__":
    key = jax.random.PRNGKey(0)
    k1, k2, k3, k4 = jax.random.split(key, 4)

    # Case 1: tiny, no extra negatives (single tile).
    projs = jax.random.normal(k1, (2, 3, 32), dtype=jnp.float32)
    extra = jax.random.normal(k2, (4, 32), dtype=jnp.float32)

    loss1, acc1 = multiview_simclr_loss(projs, None, temp=0.2)
    jax.block_until_ready((loss1, acc1))
    rl1, ra1 = _reference(projs, None, temp=0.2)
    assert np.allclose(np.asarray(loss1), np.asarray(rl1), rtol=1e-3, atol=1e-3)
    assert np.allclose(np.asarray(acc1), np.asarray(ra1), rtol=1e-3, atol=1e-3)

    # Case 2: with extra negatives (concatenated keys + torch's mod-B acc quirk).
    loss2, acc2 = multiview_simclr_loss(projs, extra, temp=0.2)
    jax.block_until_ready((loss2, acc2))
    rl2, ra2 = _reference(projs, extra, temp=0.2)
    assert np.allclose(np.asarray(loss2), np.asarray(rl2), rtol=1e-3, atol=1e-3)
    assert np.allclose(np.asarray(acc2), np.asarray(ra2), rtol=1e-3, atol=1e-3)

    # Case 3: multi-tile parallel grid (block_rows forces >1 tile) with padded
    # rows/columns and per-tile partial outputs summed in the wrapper.
    projs3 = jax.random.normal(k3, (8, 3, 32), dtype=jnp.float32)
    extra3 = jax.random.normal(k4, (4, 32), dtype=jnp.float32)
    loss3, acc3 = multiview_simclr_loss(projs3, extra3, temp=0.2, block_rows=16)
    jax.block_until_ready((loss3, acc3))
    rl3, ra3 = _reference(projs3, extra3, temp=0.2)
    assert np.allclose(np.asarray(loss3), np.asarray(rl3), rtol=1e-3, atol=1e-3)
    assert np.allclose(np.asarray(acc3), np.asarray(ra3), rtol=1e-3, atol=1e-3)

    # Case 4: opt-in bf16 MXU-operand path (perf option from the review).  Looser
    # tolerance on the loss because 1/temp amplifies bf16 quantization; the top-k
    # accuracy is discrete so only sanity-checked here.
    loss4, acc4 = multiview_simclr_loss(projs3, extra3, temp=0.2,
                                        use_bf16_matmul=True)
    jax.block_until_ready((loss4, acc4))
    rl4, ra4 = _reference(projs3, extra3, temp=0.2)
    assert np.allclose(np.asarray(loss4), np.asarray(rl4), rtol=3e-2, atol=3e-2)
    a4 = float(acc4)
    assert np.isfinite(a4) and 0.0 <= a4 <= 1.0

    print("KERNEL_OK")
</pallas_src>

<mosaic_0001>
module attributes {stable_mosaic.version = 11 : i64} {
  func.func @_simclr_kernel(%arg0: i32, %arg1: memref<8x128xf32, #tpu.memory_space<vmem>>, %arg2: memref<8x128xf32, #tpu.memory_space<vmem>>, %arg3: memref<128x128xf32, #tpu.memory_space<vmem>>, %arg4: memref<1x1x1xf32, #tpu.memory_space<vmem>>, %arg5: memref<1x1x1xf32, #tpu.memory_space<vmem>>) attributes {dimension_semantics = [#tpu.dimension_semantics<parallel>], iteration_bounds = array<i64: 1>, scalar_prefetch = 0 : i64, scratch_operands = 0 : i64, tpu.core_type = #tpu.core_type<tc>, window_params = [{transform_indices = @transform_0, window_bounds = array<i64: 8, 128>}, {transform_indices = @transform_1, window_bounds = array<i64: 8, 128>}, {pipeline_mode = #tpu.pipeline_mode<synchronous>, transform_indices = @transform_2, window_bounds = array<i64: 128, 128>}, {transform_indices = @transform_3, window_bounds = array<i64: 1, 1, 1>}, {transform_indices = @transform_4, window_bounds = array<i64: 1, 1, 1>}]} {
    %c8_i32 = arith.constant 8 : i32
    %0 = arith.muli %arg0, %c8_i32 : i32
    %c0 = arith.constant 0 : index
    %c0_0 = arith.constant 0 : index
    %1 = vector.load %arg1[%c0, %c0_0] : memref<8x128xf32, #tpu.memory_space<vmem>>, vector<8x128xf32>
    %cst = arith.constant 5.000000e+00 : f32
    %2 = vector.broadcast %cst : f32 to vector<8x128xf32>
    %3 = arith.mulf %1, %2 : vector<8x128xf32>
    %c0_1 = arith.constant 0 : index
    %c0_2 = arith.constant 0 : index
    %4 = vector.load %arg3[%c0_1, %c0_2] : memref<128x128xf32, #tpu.memory_space<vmem>>, vector<128x128xf32>
    %cst_3 = arith.constant dense<0.000000e+00> : vector<8x128xf32>
    %5 = tpu.matmul %3, %4, %cst_3 {dimension_numbers = #tpu.dot_dimension_numbers<[1], [0], [0], [1], [0, 0, 1, 1], [], []>} : vector<8x128xf32>, vector<128x128xf32>, vector<8x128xf32> -> vector<8x128xf32>
    %6 = tpu.iota {dimensions = array<i32: 1>} : vector<1x128xi32>
    %7 = tpu.iota {dimensions = array<i32: 0>} : vector<8x1xi32>
    %8 = vector.broadcast %0 : i32 to vector<8x1xi32>
    %9 = arith.addi %7, %8 : vector<8x1xi32>
    %c6_i32 = arith.constant 6 : i32
    %10 = vector.broadcast %c6_i32 : i32 to vector<8x1xi32>
    %11 = arith.cmpi slt, %9, %10 : vector<8x1xi32>
    %12 = arith.extui %11 : vector<8x1xi1> to vector<8x1xi32>
    %13 = arith.sitofp %12 : vector<8x1xi32> to vector<8x1xf32>
    %14 = vector.broadcast %6 : vector<1x128xi32> to vector<8x128xi32>
    %15 = vector.broadcast %9 : vector<8x1xi32> to vector<8x128xi32>
    %16 = arith.cmpi eq, %14, %15 : vector<8x128xi32>
    %c6_i32_4 = arith.constant 6 : i32
    %17 = vector.broadcast %c6_i32_4 : i32 to vector<1x128xi32>
    %18 = arith.cmpi sge, %6, %17 : vector<1x128xi32>
    %19 = vector.broadcast %18 : vector<1x128xi1> to vector<8x128xi1>
    %20 = arith.ori %16, %19 : vector<8x128xi1>
    %cst_5 = arith.constant 0xFF800000 : f32
    %21 = vector.broadcast %cst_5 : f32 to vector<8x128xf32>
    %22 = arith.select %20, %21, %5 : vector<8x128xi1>, vector<8x128xf32>
    %c0_6 = arith.constant 0 : index
    %c0_7 = arith.constant 0 : index
    %23 = vector.load %arg2[%c0_6, %c0_7] : memref<8x128xf32, #tpu.memory_space<vmem>>, vector<8x128xf32>
    %24 = arith.mulf %3, %23 : vector<8x128xf32>
    %cst_8 = arith.constant dense<0.000000e+00> : vector<8xf32>
    %25 = vector.multi_reduction <add>, %24, %cst_8 [1] : vector<8x128xf32> to vector<8xf32>
    %26 = vector.shape_cast %25 : vector<8xf32> to vector<8x1xf32>
    %cst_9 = arith.constant dense<0xFF800000> : vector<8xf32>
    %27 = vector.multi_reduction <maximumf>, %22, %cst_9 [1] : vector<8x128xf32> to vector<8xf32>
    %28 = vector.shape_cast %27 : vector<8xf32> to vector<8x1xf32>
    %29 = vector.broadcast %28 : vector<8x1xf32> to vector<8x128xf32>
    %30 = arith.subf %22, %29 : vector<8x128xf32>
    %31 = math.exp %30 : vector<8x128xf32>
    %cst_10 = arith.constant dense<0.000000e+00> : vector<8xf32>
    %32 = vector.multi_reduction <add>, %31, %cst_10 [1] : vector<8x128xf32> to vector<8xf32>
    %33 = vector.shape_cast %32 : vector<8xf32> to vector<8x1xf32>
    %34 = math.log %33 : vector<8x1xf32>
    %35 = arith.addf %28, %34 : vector<8x1xf32>
    %cst_11 = arith.constant 5.000000e-01 : f32
    %36 = vector.broadcast %cst_11 : f32 to vector<8x1xf32>
    %37 = arith.mulf %26, %36 : vector<8x1xf32>
    %38 = arith.subf %37, %35 : vector<8x1xf32>
    %39 = arith.mulf %38, %13 : vector<8x1xf32>
    %cst_12 = arith.constant dense<0.000000e+00> : vector<1xf32>
    %40 = vector.multi_reduction <add>, %39, %cst_12 [0] : vector<8x1xf32> to vector<1xf32>
    %41 = vector.shape_cast %40 : vector<1xf32> to vector<1x1xf32>
    %42 = vector.shape_cast %41 : vector<1x1xf32> to vector<1x1x1xf32>
    %c0_13 = arith.constant 0 : index
    %c0_14 = arith.constant 0 : index
    %c0_15 = arith.constant 0 : index
    %43 = vector.load %arg4[%c0_13, %c0_14, %c0_15] : memref<1x1x1xf32, #tpu.memory_space<vmem>>, vector<1x1x1xf32>
    tpu.vector_store %arg4[%c0_13, %c0_14, %c0_15], %42 {strides = array<i32>} : memref<1x1x1xf32, #tpu.memory_space<vmem>>, vector<1x1x1xf32>,
    %c2_i32 = arith.constant 2 : i32
    %c0_i32 = arith.constant 0 : i32
    %44 = arith.cmpi eq, %c2_i32, %c0_i32 : i32
    %c1_i32 = arith.constant 1 : i32
    %45 = arith.select %44, %c1_i32, %c2_i32 : i32
    %46 = vector.broadcast %45 : i32 to vector<1x128xi32>
    %47 = arith.remsi %6, %46 : vector<1x128xi32>
    %c0_i32_16 = arith.constant 0 : i32
    %48 = vector.broadcast %c0_i32_16 : i32 to vector<1x128xi32>
    %49 = arith.cmpi ne, %47, %48 : vector<1x128xi32>
    %c0_i32_17 = arith.constant 0 : i32
    %50 = vector.broadcast %c0_i32_17 : i32 to vector<1x128xi32>
    %51 = arith.cmpi slt, %47, %50 : vector<1x128xi32>
    %c0_i32_18 = arith.constant 0 : i32
    %52 = arith.cmpi slt, %45, %c0_i32_18 : i32
    %53 = vector.broadcast %52 : i1 to vector<1x128xi1>
    %54 = vector.broadcast %53 : vector<1x128xi1> to vector<1x128xi1>
    %55 = arith.xori %51, %54 : vector<1x128xi1>
    %56 = arith.andi %55, %49 : vector<1x128xi1>
    %57 = vector.broadcast %45 : i32 to vector<1x128xi32>
    %58 = arith.addi %47, %57 : vector<1x128xi32>
    %59 = arith.select %56, %58, %47 : vector<1x128xi1>, vector<1x128xi32>
    %c2_i32_19 = arith.constant 2 : i32
    %c0_i32_20 = arith.constant 0 : i32
    %60 = arith.cmpi eq, %c2_i32_19, %c0_i32_20 : i32
    %c1_i32_21 = arith.constant 1 : i32
    %61 = arith.select %60, %c1_i32_21, %c2_i32_19 : i32
    %62 = vector.broadcast %61 : i32 to vector<8x1xi32>
    %63 = arith.remsi %9, %62 : vector<8x1xi32>
    %c0_i32_22 = arith.constant 0 : i32
    %64 = vector.broadcast %c0_i32_22 : i32 to vector<8x1xi32>
    %65 = arith.cmpi ne, %63, %64 : vector<8x1xi32>
    %c0_i32_23 = arith.constant 0 : i32
    %66 = vector.broadcast %c0_i32_23 : i32 to vector<8x1xi32>
    %67 = arith.cmpi slt, %63, %66 : vector<8x1xi32>
    %c0_i32_24 = arith.constant 0 : i32
    %68 = arith.cmpi slt, %61, %c0_i32_24 : i32
    %69 = vector.broadcast %68 : i1 to vector<8x1xi1>
    %70 = vector.broadcast %69 : vector<8x1xi1> to vector<8x1xi1>
    %71 = arith.xori %67, %70 : vector<8x1xi1>
    %72 = arith.andi %71, %65 : vector<8x1xi1>
    %73 = vector.broadcast %61 : i32 to vector<8x1xi32>
    %74 = arith.addi %63, %73 : vector<8x1xi32>
    %75 = arith.select %72, %74, %63 : vector<8x1xi1>, vector<8x1xi32>
    %76 = vector.broadcast %59 : vector<1x128xi32> to vector<8x128xi32>
    %77 = vector.broadcast %75 : vector<8x1xi32> to vector<8x128xi32>
    %78 = arith.cmpi eq, %76, %77 : vector<8x128xi32>
    %79 = vector.broadcast %28 : vector<8x1xf32> to vector<8x128xf32>
    %80 = arith.cmpf oge, %22, %79 : vector<8x128xf32>
    %cst_25 = arith.constant 0xFF800000 : f32
    %81 = vector.broadcast %cst_25 : f32 to vector<8x128xf32>
    %82 = arith.select %80, %81, %22 : vector<8x128xi1>, vector<8x128xf32>
    %cst_26 = arith.constant dense<0xFF800000> : vector<8xf32>
    %83 = vector.multi_reduction <maximumf>, %82, %cst_26 [1] : vector<8x128xf32> to vector<8xf32>
    %84 = vector.shape_cast %83 : vector<8xf32> to vector<8x1xf32>
    %85 = vector.broadcast %84 : vector<8x1xf32> to vector<8x128xf32>
    %86 = arith.cmpf oge, %22, %85 : vector<8x128xf32>
    %87 = arith.andi %78, %86 : vector<8x128xi1>
    %cst_27 = arith.constant 1.000000e+00 : f32
    %cst_28 = arith.constant 0.000000e+00 : f32
    %88 = vector.broadcast %cst_27 : f32 to vector<8x128xf32>
    %89 = vector.broadcast %cst_28 : f32 to vector<8x128xf32>
    %90 = arith.select %87, %88, %89 : vector<8x128xi1>, vector<8x128xf32>
    %cst_29 = arith.constant dense<0.000000e+00> : vector<8xf32>
    %91 = vector.multi_reduction <add>, %90, %cst_29 [1] : vector<8x128xf32> to vector<8xf32>
    %92 = vector.shape_cast %91 : vector<8xf32> to vector<8x1xf32>
    %cst_30 = arith.constant 2.000000e+00 : f32
    %93 = vector.broadcast %cst_30 : f32 to vector<8x1xf32>
    %94 = arith.minimumf %92, %93 : vector<8x1xf32>
    %95 = arith.mulf %94, %13 : vector<8x1xf32>
    %cst_31 = arith.constant dense<0.000000e+00> : vector<1xf32>
    %96 = vector.multi_reduction <add>, %95, %cst_31 [0] : vector<8x1xf32> to vector<1xf32>
    %97 = vector.shape_cast %96 : vector<1xf32> to vector<1x1xf32>
    %98 = vector.shape_cast %97 : vector<1x1xf32> to vector<1x1x1xf32>
    %c0_32 = arith.constant 0 : index
    %c0_33 = arith.constant 0 : index
    %c0_34 = arith.constant 0 : index
    %99 = vector.load %arg5[%c0_32, %c0_33, %c0_34] : memref<1x1x1xf32, #tpu.memory_space<vmem>>, vector<1x1x1xf32>
    tpu.vector_store %arg5[%c0_32, %c0_33, %c0_34], %98 {strides = array<i32>} : memref<1x1x1xf32, #tpu.memory_space<vmem>>, vector<1x1x1xf32>,
    return
  }
  func.func @transform_0(%arg0: i32) -> (i32, i32) {
    %c0_i32 = arith.constant 0 : i32
    %c0_i32_0 = arith.constant 0 : i32
    return %arg0, %c0_i32 : i32, i32
  }
  func.func @transform_1(%arg0: i32) -> (i32, i32) {
    %c0_i32 = arith.constant 0 : i32
    %c0_i32_0 = arith.constant 0 : i32
    return %arg0, %c0_i32 : i32, i32
  }
  func.func @transform_2(%arg0: i32) -> (i32, i32) {
    %c0_i32 = arith.constant 0 : i32
    %c0_i32_0 = arith.constant 0 : i32
    %c0_i32_1 = arith.constant 0 : i32
    return %c0_i32, %c0_i32_0 : i32, i32
  }
  func.func @transform_3(%arg0: i32) -> (i32, i32, i32) {
    %c0_i32 = arith.constant 0 : i32
    %c0_i32_0 = arith.constant 0 : i32
    %c0_i32_1 = arith.constant 0 : i32
    return %arg0, %c0_i32, %c0_i32_0 : i32, i32, i32
  }
  func.func @transform_4(%arg0: i32) -> (i32, i32, i32) {
    %c0_i32 = arith.constant 0 : i32
    %c0_i32_0 = arith.constant 0 : i32
    %c0_i32_1 = arith.constant 0 : i32
    return %arg0, %c0_i32, %c0_i32_0 : i32, i32, i32
  }
}

</mosaic_0001>

<llo_original>
// kernel: tpu_custom_call.1
$region0: #{tpu_custom_call.1}
  #allocation0 [shape = 'u32[]', space=smem, size = 0x4, offset = 0x4, fixed_abs, tag = 'smem constant byte address 0x4 - core index']
  #allocation1 [shape = 'u32[144,128]{1,0:T(1,128)}', space=vmem, size = 0x12000, scoped, tag = 'internal scratch']
  %s0 = inlined_call_operand.hbm [shape: f32[8,128], index: 0, kind: input, shape index: {}]
  %s1 = inlined_call_operand.hbm [shape: f32[8,128], index: 1, kind: input, shape index: {}]
  %s2 = inlined_call_operand.hbm [shape: f32[128,128], index: 2, kind: input, shape index: {}]
  %s3 = inlined_call_operand.hbm [shape: f32[1,1,1], index: 3, kind: output, shape index: {0}]
  %s4 = inlined_call_operand.hbm [shape: f32[1,1,1], index: 4, kind: output, shape index: {1}]
  %5 = xla_tuple %s3, %s4
  %s6 = sld [smem:[#allocation0]]
  $region42: #{tpu_custom_call.1} parent=0
    _
  %s8 = ssub.s32 1, %s6
  %s9 = scalar_select 0, %s8, %s6
  $region1: #{tpu_custom_call.1} parent=0
    #allocation2 [shape = 'u8[4096]{0}', space=vmem, size = 0x1000, scoped, tag = 'input window, operand 0, single buffered']
    #allocation3 [shape = 's32[1]{0}', space=sflag, size = 0x4, scoped, tag = 'scoped memory for tpu_custom_call.1']
    #allocation4 [shape = 's32[1]{0}', space=sflag, size = 0x4, scoped, tag = 'scoped memory for tpu_custom_call.1']
    #allocation5 [shape = 'u8[4096]{0}', space=vmem, size = 0x1000, scoped, tag = 'input window, operand 1, single buffered']
    #allocation6 [shape = 's32[1]{0}', space=sflag, size = 0x4, scoped, tag = 'scoped memory for tpu_custom_call.1']
    #allocation7 [shape = 'u8[65536]{0}', space=vmem, size = 0x10000, scoped, tag = 'input window, operand 2, single buffered']
    #allocation8 [shape = 'u8[512]{0}', space=vmem, size = 0x400, scoped, tag = 'output window, operand 0, single buffered']
    #allocation9 [shape = 'u8[512]{0}', space=vmem, size = 0x400, scoped, tag = 'output window, operand 1, single buffered']
    #allocation10 [shape = 's32[1]{0}', space=sflag, size = 0x4, scoped, tag = 'scoped memory for tpu_custom_call.1']
    %10 = vsyncpa [#allocation3], 0
    %11 = vsyncpa [#allocation6], 0
    %12 = vsyncpa [#allocation4], 0
    %13 = vsyncpa [#allocation10], 0
    // Predicated region
    $region2: #{tpu_custom_call.1} parent=1 // pred_check
      _
    $region3: #{tpu_custom_call.1} parent=1 // pred_check_branch
      %15 = sbr.rel (0) target = $region5
    $region4: #{tpu_custom_call.1} parent=1 // pred_region
      %s17 = ssub.s32 128, 128
      %18 = vsyncadd [#allocation3], %s17
      %s20 = sshll.u32 [#allocation2], 4
      %s21 = int_to_ptr.vmem [resolvable:$true] %s20
      %23 = dma.hbm_to_vmem [thread:$0]  %s0, 128, %s21, [#allocation3]
    $region5: #{tpu_custom_call.1} parent=1 // pred_fallthru
      _
    // Predicated region
    $region6: #{tpu_custom_call.1} parent=1 // pred_check
      _
    $region7: #{tpu_custom_call.1} parent=1 // pred_check_branch
      %25 = sbr.rel (0) target = $region9
    $region8: #{tpu_custom_call.1} parent=1 // pred_region
      %s27 = ssub.s32 128, 128
      %28 = vsyncadd [#allocation6], %s27
      %s30 = sshll.u32 [#allocation5], 4
      %s31 = int_to_ptr.vmem [resolvable:$true] %s30
      %33 = dma.hbm_to_vmem [thread:$0]  %s1, 128, %s31, [#allocation6]
    $region9: #{tpu_custom_call.1} parent=1 // pred_fallthru
      _
    // Predicated region
    $region10: #{tpu_custom_call.1} parent=1 // pred_check
      _
    $region11: #{tpu_custom_call.1} parent=1 // pred_check_branch
      %35 = sbr.rel (0) target = $region13
    $region12: #{tpu_custom_call.1} parent=1 // pred_region
      %s37 = ssub.s32 2048, 2048
      %38 = vsyncadd [#allocation6], %s37
      %s39 = sshll.u32 [#allocation7], 4
      %s40 = int_to_ptr.vmem [resolvable:$true] %s39
      %45 = dma.hbm_to_vmem [thread:$0]  %s2, 2048, %s40, [#allocation6], 128, 128, 8
    $region13: #{tpu_custom_call.1} parent=1 // pred_fallthru
      _
    // Predicated region
    $region14: #{tpu_custom_call.1} parent=1 // pred_check
      _
    $region15: #{tpu_custom_call.1} parent=1 // pred_check_branch
      %47 = sbr.rel (0) target = $region17
    $region16: #{tpu_custom_call.1} parent=1 // pred_region
      %48 = dma.done [#allocation3], 128
    $region17: #{tpu_custom_call.1} parent=1 // pred_fallthru
      _
    // Predicated region
    $region18: #{tpu_custom_call.1} parent=1 // pred_check
      _
    $region19: #{tpu_custom_call.1} parent=1 // pred_check_branch
      %50 = sbr.rel (0) target = $region21
    $region20: #{tpu_custom_call.1} parent=1 // pred_region
      %51 = dma.done [#allocation6], 128
    $region21: #{tpu_custom_call.1} parent=1 // pred_fallthru
      _
    // Predicated region
    $region22: #{tpu_custom_call.1} parent=1 // pred_check
      _
    $region23: #{tpu_custom_call.1} parent=1 // pred_check_branch
      %53 = sbr.rel (0) target = $region25
    $region24: #{tpu_custom_call.1} parent=1 // pred_region
      %54 = dma.done [#allocation6], 2048
    $region25: #{tpu_custom_call.1} parent=1 // pred_fallthru
      _
    %s55 = smul.u32 0, 8
    %v56 = vld [vmem:[#allocation2] sm:$0xff]
    %v57 = vmul.f32 %v56, 5.0
    %v58 = vld [vmem:[#allocation7] sm:$0xff]
    %v59 = vld [vmem:[#allocation7 + $0x8] sm:$0xff]
    %v60 = vld [vmem:[#allocation7 + $0x10] sm:$0xff]
    %v61 = vld [vmem:[#allocation7 + $0x18] sm:$0xff]
    %v62 = vld [vmem:[#allocation7 + $0x20] sm:$0xff]
    %v63 = vld [vmem:[#allocation7 + $0x28] sm:$0xff]
    %v64 = vld [vmem:[#allocation7 + $0x30] sm:$0xff]
    %v65 = vld [vmem:[#allocation7 + $0x38] sm:$0xff]
    %v66 = vld [vmem:[#allocation7 + $0x40] sm:$0xff]
    %v67 = vld [vmem:[#allocation7 + $0x48] sm:$0xff]
    %v68 = vld [vmem:[#allocation7 + $0x50] sm:$0xff]
    %v69 = vld [vmem:[#allocation7 + $0x58] sm:$0xff]
    %v70 = vld [vmem:[#allocation7 + $0x60] sm:$0xff]
    %v71 = vld [vmem:[#allocation7 + $0x68] sm:$0xff]
    %v72 = vld [vmem:[#allocation7 + $0x70] sm:$0xff]
    %v73 = vld [vmem:[#allocation7 + $0x78] sm:$0xff]
    %74 = vmatprep.subr.mxu0 0.0
    %75 = vmatpush1.msra.mxu0 %v58
    %76 = vmatprep.subr.mxu0 0.0
    %77 = vmatpush1.msra.mxu0 %v59
    %78 = vmatprep.subr.mxu0 0.0
    %79 = vmatpush1.msra.mxu0 %v60
    %80 = vmatprep.subr.mxu0 0.0
    %81 = vmatpush1.msra.mxu0 %v61
    %82 = vmatprep.subr.mxu0 0.0
    %83 = vmatpush1.msra.mxu0 %v62
    %84 = vmatprep.subr.mxu0 0.0
    %85 = vmatpush1.msra.mxu0 %v63
    %86 = vmatprep.subr.mxu0 0.0
    %87 = vmatpush1.msra.mxu0 %v64
    %88 = vmatprep.subr.mxu0 0.0
    %89 = vmatpush1.msra.mxu0 %v65
    %90 = vmatprep.subr.mxu0 0.0
    %91 = vmatpush1.msra.mxu0 %v66
    %92 = vmatprep.subr.mxu0 0.0
    %93 = vmatpush1.msra.mxu0 %v67
    %94 = vmatprep.subr.mxu0 0.0
    %95 = vmatpush1.msra.mxu0 %v68
    %96 = vmatprep.subr.mxu0 0.0
    %97 = vmatpush1.msra.mxu0 %v69
    %98 = vmatprep.subr.mxu0 0.0
    %99 = vmatpush1.msra.mxu0 %v70
    %100 = vmatprep.subr.mxu0 0.0
    %101 = vmatpush1.msra.mxu0 %v71
    %102 = vmatprep.subr.mxu0 0.0
    %103 = vmatpush1.msra.mxu0 %v72
    %104 = vmatprep.subr.mxu0 0.0
    %105 = vmatpush1.msra.mxu0 %v73
    %106 = vmatprep.subr.mxu0 0.0
    %107 = vmatpush1.msra.mxu0 0.0
    %108 = vmatprep.subr.mxu0 0.0
    %109 = vmatpush1.msra.mxu0 0.0
    %110 = vmatprep.subr.mxu0 0.0
    %111 = vmatpush1.msra.mxu0 0.0
    %112 = vmatprep.subr.mxu0 0.0
    %113 = vmatpush1.msra.mxu0 0.0
    %114 = vmatprep.subr.mxu0 0.0
    %115 = vmatpush1.msra.mxu0 0.0
    %116 = vmatprep.subr.mxu0 0.0
    %117 = vmatpush1.msra.mxu0 0.0
    %118 = vmatprep.subr.mxu0 0.0
    %119 = vmatpush1.msra.mxu0 0.0
    %120 = vmatprep.subr.mxu0 0.0
    %121 = vmatpush1.msra.mxu0 0.0
    %122 = vmatprep.subr.mxu0 0.0
    %123 = vmatpush1.msra.mxu0 0.0
    %124 = vmatprep.subr.mxu0 0.0
    %125 = vmatpush1.msra.mxu0 0.0
    %126 = vmatprep.subr.mxu0 0.0
    %127 = vmatpush1.msra.mxu0 0.0
    %128 = vmatprep.subr.mxu0 0.0
    %129 = vmatpush1.msra.mxu0 0.0
    %130 = vmatprep.subr.mxu0 0.0
    %131 = vmatpush1.msra.mxu0 0.0
    %132 = vmatprep.subr.mxu0 0.0
    %133 = vmatpush1.msra.mxu0 0.0
    %134 = vmatprep.subr.mxu0 0.0
    %135 = vmatpush1.msra.mxu0 0.0
    %136 = vmatprep.subr.mxu0 0.0
    %137 = vmatpush1.msra.mxu0 0.0
    %138 = vmatprep.mubr.f32.mxu0 0.0
    %139 = vmatmul.mubr.f32.gmra.mrb[0].mxu0 %v57
    %v140 = vpop.f32.mrb[0].mxu0
    %v141 = vadd.f32 0.0, %v140
    %v142 = vpop.f32.mrb[0].mxu0
    %143 = vdwg.mxu0
    %v144 = vlaneseq
    %v145 = vand.u32 %v144, 127
    %v146 = vlaneseq
    %v147 = vshrl.u32 %v146, 7
    %v148 = vstv %s55
    %v149 = vadd.s32 %v147, %v148
    %vm150 = vcmp.lt.s32.totalorder %v149, 6
    %v151 = vsel %vm150, 1, 0
    %v152 = vcvt.s32.f32 %v151
    %vm153 = vcmp.eq.s32.totalorder %v145, %v149
    %vm154 = vcmp.ge.s32.totalorder %v145, 6
    %v155 = vsel %vm154, 1, 0
    %vm156 = vcmp.eq.s32.totalorder %v155, 1
    %vm157 = vmor %vm153, %vm156
    %v158 = vsel %vm157, -inf, %v141
    %v159 = vld [vmem:[#allocation5] sm:$0xff]
    %v160 = vmul.f32 %v57, %v159
    %161 = vadd.xlane.f32.xlu0 %v160
    %v162 = vpop.xlane.xlu0 %161
    %163 = vmax.xlane.f32.xlu0 %v158
    %v164 = vpop.xlane.xlu0 %163
    %v165 = vsub.f32 %v158, %v164
    %v166 = vmul.f32 %v165, 1.442695
    %v167 = vpow.pop %v166
    %168 = vadd.xlane.f32.xlu0 %v167
    %v169 = vpop.xlane.xlu0 %168
    %v170 = vlog2.pop %v169
    %v171 = vmul.f32 %v170, 0.6931472
    %v172 = vadd.f32 %v164, %v171
    %v173 = vmul.f32 %v162, 0.5
    %v174 = vsub.f32 %v173, %v172
    %v175 = vmul.f32 %v174, %v152
    %v176 = vrot.slane %v175, 4
    %v177 = vadd.f32 %v175, %v176
    %v178 = vrot.slane %v177, 2
    %v179 = vadd.f32 %v177, %v178
    %v180 = vrot.slane %v179, 1
    %v181 = vadd.f32 %v179, %v180
    %vm182 = vcmask 0
    %183 = vst.msk [vmem:[#allocation8] sm:$0x1] %vm182, %v181
    %vm184 = vcmp.lt.s32.totalorder %v145, 0
    %v185 = vsub.s32 0, %v145
    %v186 = vsel %vm184, %v185, %v145
    %v187 = vshrl.u32 %v186, 1
    %v188 = vand.u32 %v186, 1
    %v189 = vsub.s32 0, %v188
    %v190 = vsel %vm184, %v189, %v188
    %vm191 = vcmp.ne.s32.totalorder %v190, 0
    %vm192 = vcmp.lt.s32.totalorder %v190, 0
    %vm193 = vmand %vm192, %vm191
    %v194 = vadd.s32 %v190, 2
    %v195 = vsel %vm193, %v194, %v190
    %vm196 = vcmp.lt.s32.totalorder %v149, 0
    %v197 = vsub.s32 0, %v149
    %v198 = vsel %vm196, %v197, %v149
    %v199 = vshrl.u32 %v198, 1
    %v200 = vand.u32 %v198, 1
    %v201 = vsub.s32 0, %v200
    %v202 = vsel %vm196, %v201, %v200
    %vm203 = vcmp.ne.s32.totalorder %v202, 0
    %vm204 = vcmp.lt.s32.totalorder %v202, 0
    %vm205 = vmand %vm204, %vm203
    %v206 = vadd.s32 %v202, 2
    %v207 = vsel %vm205, %v206, %v202
    %vm208 = vcmp.eq.s32.totalorder %v195, %v207
    %vm209 = vcmp.ge.f32.partialorder %v158, %v164
    %v210 = vsel %vm209, -inf, %v158
    %211 = vmax.xlane.f32.xlu0 %v210
    %v212 = vpop.xlane.xlu0 %211
    %vm213 = vcmp.ge.f32.partialorder %v158, %v212
    %vm214 = vmand %vm208, %vm213
    %v215 = vsel %vm214, 1.0, 0.0
    %216 = vadd.xlane.f32.xlu0 %v215
    %v217 = vpop.xlane.xlu0 %216
    %v218 = vmin.f32 %v217, 2.0
    %v219 = vmul.f32 %v218, %v152
    %v220 = vrot.slane %v219, 4
    %v221 = vadd.f32 %v219, %v220
    %v222 = vrot.slane %v221, 2
    %v223 = vadd.f32 %v221, %v222
    %v224 = vrot.slane %v223, 1
    %v225 = vadd.f32 %v223, %v224
    %226 = vst.msk [vmem:[#allocation9] sm:$0x1] %vm182, %v225
    // Predicated region
    $region26: #{tpu_custom_call.1} parent=1 // pred_check
      _
    $region27: #{tpu_custom_call.1} parent=1 // pred_check_branch
      %228 = sbr.rel (0) target = $region29
    $region28: #{tpu_custom_call.1} parent=1 // pred_region
      %s230 = ssub.s32 16, 16
      %231 = vsyncadd [#allocation4], %s230
      %s233 = sshll.u32 [#allocation8], 4
      %s234 = int_to_ptr.vmem [resolvable:$true] %s233
      %236 = dma.vmem_to_hbm [thread:$0]  %s234, 16, %s3, [#allocation4]
    $region29: #{tpu_custom_call.1} parent=1 // pred_fallthru
      _
    // Predicated region
    $region30: #{tpu_custom_call.1} parent=1 // pred_check
      _
    $region31: #{tpu_custom_call.1} parent=1 // pred_check_branch
      %238 = sbr.rel (0) target = $region33
    $region32: #{tpu_custom_call.1} parent=1 // pred_region
      %s240 = ssub.s32 16, 16
      %241 = vsyncadd [#allocation10], %s240
      %s243 = sshll.u32 [#allocation9], 4
      %s244 = int_to_ptr.vmem [resolvable:$true] %s243
      %246 = dma.vmem_to_hbm [thread:$0]  %s244, 16, %s4, [#allocation10]
    $region33: #{tpu_custom_call.1} parent=1 // pred_fallthru
      _
    // Predicated region
    $region34: #{tpu_custom_call.1} parent=1 // pred_check
      _
    $region35: #{tpu_custom_call.1} parent=1 // pred_check_branch
      %248 = sbr.rel (0) target = $region37
    $region36: #{tpu_custom_call.1} parent=1 // pred_region
      %249 = dma.done [#allocation4], 16
    $region37: #{tpu_custom_call.1} parent=1 // pred_fallthru
      _
    // Predicated region
    $region38: #{tpu_custom_call.1} parent=1 // pred_check
      _
    $region39: #{tpu_custom_call.1} parent=1 // pred_check_branch
      %251 = sbr.rel (0) target = $region41
    $region40: #{tpu_custom_call.1} parent=1 // pred_region
      %252 = dma.done [#allocation10], 16
    $region41: #{tpu_custom_call.1} parent=1 // pred_fallthru
      _
    %253 = vsyncpa [#allocation3], 1
    %254 = vsyncpa [#allocation6], 1
    %255 = vsyncpa [#allocation4], 1
    %256 = vsyncpa [#allocation10], 1

</llo_original>
